<compile_context>
chip_gen: v6e
topology: v6e:2x2x1
jax: 0.10.0
libtpu: 0.0.40
codegen_flags: <defaults>
</compile_context>

<pallas_src>
import jax
import jax.numpy as jnp
import numpy as np
from jax.experimental import pallas as pl
from jax.experimental.pallas import tpu as pltpu


# ----------------------------------------------------------------------------
# Fused Pallas kernel: all ResBlocks for one image, lane-dense (H, W*C) layout
# ----------------------------------------------------------------------------
def _resnet_kernel(x_ref, w_ref, b_ref, out_ref, xcat_ref):
    # x_ref/out_ref block: (1, H, W*C); w_ref: (NB, 2, 3*W*C, W*C);
    # b_ref: (NB, 2, 1, W*C); xcat_ref scratch: (H, 3*W*C) im2col buffer.
    _, H, WC = out_ref.shape
    num_blocks = w_ref.shape[0]

    # Zero the im2col buffer once.  The top halo row of the dy=0 band and the
    # bottom halo row of the dy=2 band are never written afterwards, so they
    # provide the "same" zero padding (in H) for every conv in the network.
    xcat_ref[...] = jnp.zeros_like(xcat_ref)

    def conv3x3(act, blk, idx, leaky):
        # act: (H, WC) f32.  Scatter the three dy-shifted copies of the
        # activation into lane-aligned 128-wide bands of the im2col buffer,
        # then a single MXU matmul (H, 3*WC) x (3*WC, WC) performs the whole
        # 3x3 conv (dx taps + left/right padding are baked into the weights).
        xcat_ref[1:H, 0:WC] = act[0:H - 1, :]             # dy = 0 (shift down)
        xcat_ref[:, WC:2 * WC] = act                      # dy = 1 (center)
        xcat_ref[0:H - 1, 2 * WC:3 * WC] = act[1:H, :]    # dy = 2 (shift up)
        acc = jnp.dot(xcat_ref[...], w_ref[blk, idx],
                      preferred_element_type=jnp.float32)
        acc = acc + b_ref[blk, idx]                       # (1, WC) broadcast
        if leaky:
            acc = jnp.where(acc > 0, acc, 0.01 * acc)     # nn.LeakyReLU default
        return acc

    x = x_ref[0]                                          # (H, WC)
    for blk in range(num_blocks):
        h = conv3x3(x, blk, 0, leaky=True)                # conv1 + LeakyReLU
        x = x + conv3x3(h, blk, 1, leaky=False)           # conv2 + residual
    out_ref[0] = x


def resnet_forward_pallas(x_nchw, w_packed, b_packed):
    """Forward pass of the full ResNet in a single pallas_call.

    x_nchw:   (B, C, H, W) float32 (PyTorch layout)
    w_packed: (NB, 2, 3*W*C, W*C) float32  (pre-packed, see pack_params)
    b_packed: (NB, 2, 1, W*C)     float32
    """
    B, C, H, W = x_nchw.shape
    WC = W * C

    # NCHW -> NHWC -> (B, H, W*C): channels fastest on the 128-wide lane axis.
    x = jnp.transpose(x_nchw, (0, 2, 3, 1)).reshape(B, H, WC)

    out = pl.pallas_call(
        _resnet_kernel,
        out_shape=jax.ShapeDtypeStruct((B, H, WC), jnp.float32),
        grid=(B,),
        in_specs=[
            pl.BlockSpec((1, H, WC), lambda b: (b, 0, 0)),
            pl.BlockSpec(w_packed.shape, lambda b: (0,) * w_packed.ndim),
            pl.BlockSpec(b_packed.shape, lambda b: (0,) * b_packed.ndim),
        ],
        out_specs=pl.BlockSpec((1, H, WC), lambda b: (b, 0, 0)),
        scratch_shapes=[pltpu.VMEM((H, 3 * WC), jnp.float32)],
        compiler_params=pltpu.CompilerParams(
            dimension_semantics=("parallel",)),
    )(x, w_packed, b_packed)

    return jnp.transpose(out.reshape(B, H, W, C), (0, 3, 1, 2))


# ----------------------------------------------------------------------------
# Parameter construction / packing
# ----------------------------------------------------------------------------
def init_resnet_params(key, num_blocks, dim):
    """Deterministic synthetic parameters (per block: conv1, conv2).

    Weights are stored in HWIO layout (3, 3, Cin, Cout); biases as (Cout,).
    """
    params = []
    for _ in range(num_blocks):
        block = {}
        for name in ("conv1", "conv2"):
            key, kw, kb = jax.random.split(key, 3)
            w_oihw = jax.random.normal(kw, (dim, dim, 3, 3), jnp.float32) * 0.05
            bias = jax.random.normal(kb, (dim,), jnp.float32) * 0.05
            w_hwio = jnp.transpose(w_oihw, (2, 3, 1, 0))   # (3,3,Cin,Cout)
            block[name] = (w_hwio, bias)
        params.append(block)
    return params


def pack_params(params, W):
    """Pack conv weights into lane-dense block-banded matrices (done once).

    For each conv, build M of shape (3*W*C, W*C) with
      M[dy*W*C + w_in*C + ci, w_out*C + co] = w_hwio[dy, w_in - w_out + 1, ci, co]
    when |w_in - w_out| <= 1, else 0.  With the kernel's im2col buffer
      xcat[h, dy*W*C + w*C + c] = x[h + dy - 1, w*C + c]   (zero outside H),
    the conv becomes a single matmul  out[h] = xcat[h] @ M + bias_tiled,
    so the dx stencil and the left/right zero padding are baked into M.
    """
    num_blocks = len(params)
    C = int(params[0]["conv1"][0].shape[2])
    WC = W * C
    w_all = np.zeros((num_blocks, 2, 3 * WC, WC), np.float32)
    b_all = np.zeros((num_blocks, 2, 1, WC), np.float32)
    for blk, block in enumerate(params):
        for idx, name in enumerate(("conv1", "conv2")):
            w_hwio, bias = block[name]
            w_np = np.asarray(w_hwio)
            for dy in range(3):
                for w_in in range(W):
                    for dx in range(3):
                        w_out = w_in - dx + 1
                        if 0 <= w_out < W:
                            w_all[blk, idx,
                                  dy * WC + w_in * C:dy * WC + (w_in + 1) * C,
                                  w_out * C:(w_out + 1) * C] = w_np[dy, dx]
            b_all[blk, idx, 0] = np.tile(np.asarray(bias), W)
    return jnp.asarray(w_all), jnp.asarray(b_all)


# ----------------------------------------------------------------------------
# Pure-JAX reference for verification
# ----------------------------------------------------------------------------
def resnet_forward_ref(x_nchw, params):
    x = jnp.transpose(x_nchw, (0, 2, 3, 1))
    dn = ("NHWC", "HWIO", "NHWC")
    for block in params:
        w1, b1 = block["conv1"]
        w2, b2 = block["conv2"]
        h = jax.lax.conv_general_dilated(x, w1, (1, 1), "SAME",
                                         dimension_numbers=dn) + b1
        h = jnp.where(h > 0, h, 0.01 * h)
        y = jax.lax.conv_general_dilated(h, w2, (1, 1), "SAME",
                                         dimension_numbers=dn) + b2
        x = x + y
    return jnp.transpose(x, (0, 3, 1, 2))


if __name__ == "__main__":
    # hp = {'num_blocks': 2, 'backbone_dimension': 8}
    NUM_BLOCKS = 2
    DIM = 8                      # backbone_dimension; W * DIM = 128 (lane-dense)
    B, H, W = 2, 16, 16

    key = jax.random.PRNGKey(0)
    key, kx = jax.random.split(key)
    x = jax.random.normal(kx, (B, DIM, H, W), jnp.float32)   # NCHW, like PyTorch

    params = init_resnet_params(key, NUM_BLOCKS, DIM)
    w_packed, b_packed = pack_params(params, W)              # packed once

    run = jax.jit(resnet_forward_pallas)
    out = jax.block_until_ready(run(x, w_packed, b_packed))

    ref = jax.block_until_ready(resnet_forward_ref(x, params))
    np.testing.assert_allclose(np.asarray(out), np.asarray(ref),
                               rtol=1e-4, atol=1e-4)

    print("KERNEL_OK")
</pallas_src>

<mosaic_0001>
module attributes {stable_mosaic.version = 11 : i64} {
  func.func @_resnet_kernel(%arg0: i32, %arg1: memref<1x16x128xf32, #tpu.memory_space<vmem>>, %arg2: memref<2x2x384x128xf32, #tpu.memory_space<vmem>>, %arg3: memref<2x2x1x128xf32, #tpu.memory_space<vmem>>, %arg4: memref<1x16x128xf32, #tpu.memory_space<vmem>>, %arg5: memref<16x384xf32, #tpu.memory_space<vmem>>) attributes {dimension_semantics = [#tpu.dimension_semantics<parallel>], iteration_bounds = array<i64: 2>, scalar_prefetch = 0 : i64, scratch_operands = 1 : i64, tpu.core_type = #tpu.core_type<tc>, window_params = [{transform_indices = @transform_0, window_bounds = array<i64: 1, 16, 128>}, {pipeline_mode = #tpu.pipeline_mode<synchronous>, transform_indices = @transform_1, window_bounds = array<i64: 2, 2, 384, 128>}, {pipeline_mode = #tpu.pipeline_mode<synchronous>, transform_indices = @transform_2, window_bounds = array<i64: 2, 2, 1, 128>}, {transform_indices = @transform_3, window_bounds = array<i64: 1, 16, 128>}]} {
    %cst = arith.constant 0.000000e+00 : f32
    %0 = vector.broadcast %cst : f32 to vector<16x384xf32>
    %c0 = arith.constant 0 : index
    %c0_0 = arith.constant 0 : index
    %1 = vector.load %arg5[%c0, %c0_0] : memref<16x384xf32, #tpu.memory_space<vmem>>, vector<16x384xf32>
    tpu.vector_store %arg5[%c0, %c0_0], %0 {strides = array<i32>} : memref<16x384xf32, #tpu.memory_space<vmem>>, vector<16x384xf32>,
    %c0_1 = arith.constant 0 : index
    %c0_2 = arith.constant 0 : index
    %c0_3 = arith.constant 0 : index
    %2 = vector.load %arg1[%c0_1, %c0_2, %c0_3] : memref<1x16x128xf32, #tpu.memory_space<vmem>>, vector<1x16x128xf32>
    %3 = vector.shape_cast %2 : vector<1x16x128xf32> to vector<16x128xf32>
    %4 = vector.extract_strided_slice %3 {offsets = [0, 0], sizes = [15, 128], strides = [1, 1]} : vector<16x128xf32> to vector<15x128xf32>
    %c1 = arith.constant 1 : index
    %c0_4 = arith.constant 0 : index
    %5 = vector.load %arg5[%c1, %c0_4] : memref<16x384xf32, #tpu.memory_space<vmem>>, vector<15x128xf32>
    tpu.vector_store %arg5[%c1, %c0_4], %4 {strides = array<i32>} : memref<16x384xf32, #tpu.memory_space<vmem>>, vector<15x128xf32>,
    %c0_5 = arith.constant 0 : index
    %c128 = arith.constant 128 : index
    %6 = vector.load %arg5[%c0_5, %c128] : memref<16x384xf32, #tpu.memory_space<vmem>>, vector<16x128xf32>
    tpu.vector_store %arg5[%c0_5, %c128], %3 {strides = array<i32>} : memref<16x384xf32, #tpu.memory_space<vmem>>, vector<16x128xf32>,
    %7 = vector.extract_strided_slice %3 {offsets = [1, 0], sizes = [15, 128], strides = [1, 1]} : vector<16x128xf32> to vector<15x128xf32>
    %c0_6 = arith.constant 0 : index
    %c256 = arith.constant 256 : index
    %8 = vector.load %arg5[%c0_6, %c256] : memref<16x384xf32, #tpu.memory_space<vmem>>, vector<15x128xf32>
    tpu.vector_store %arg5[%c0_6, %c256], %7 {strides = array<i32>} : memref<16x384xf32, #tpu.memory_space<vmem>>, vector<15x128xf32>,
    %c0_7 = arith.constant 0 : index
    %c0_8 = arith.constant 0 : index
    %9 = vector.load %arg5[%c0_7, %c0_8] : memref<16x384xf32, #tpu.memory_space<vmem>>, vector<16x384xf32>
    %c0_9 = arith.constant 0 : index
    %c0_10 = arith.constant 0 : index
    %c0_11 = arith.constant 0 : index
    %c0_12 = arith.constant 0 : index
    %10 = vector.load %arg2[%c0_9, %c0_10, %c0_11, %c0_12] : memref<2x2x384x128xf32, #tpu.memory_space<vmem>>, vector<1x1x384x128xf32>
    %11 = vector.shape_cast %10 : vector<1x1x384x128xf32> to vector<384x128xf32>
    %cst_13 = arith.constant dense<0.000000e+00> : vector<16x128xf32>
    %12 = tpu.matmul %9, %11, %cst_13 {dimension_numbers = #tpu.dot_dimension_numbers<[1], [0], [0], [1], [0, 0, 1, 1], [], []>} : vector<16x384xf32>, vector<384x128xf32>, vector<16x128xf32> -> vector<16x128xf32>
    %c0_14 = arith.constant 0 : index
    %c0_15 = arith.constant 0 : index
    %c0_16 = arith.constant 0 : index
    %c0_17 = arith.constant 0 : index
    %13 = vector.load %arg3[%c0_14, %c0_15, %c0_16, %c0_17] : memref<2x2x1x128xf32, #tpu.memory_space<vmem>>, vector<1x1x1x128xf32>
    %14 = vector.shape_cast %13 : vector<1x1x1x128xf32> to vector<1x128xf32>
    %15 = vector.broadcast %14 : vector<1x128xf32> to vector<16x128xf32>
    %16 = arith.addf %12, %15 : vector<16x128xf32>
    %cst_18 = arith.constant 0.000000e+00 : f32
    %17 = vector.broadcast %cst_18 : f32 to vector<16x128xf32>
    %18 = arith.cmpf ogt, %16, %17 : vector<16x128xf32>
    %cst_19 = arith.constant 0.00999999977 : f32
    %19 = vector.broadcast %cst_19 : f32 to vector<16x128xf32>
    %20 = arith.mulf %19, %16 : vector<16x128xf32>
    %21 = arith.select %18, %16, %20 : vector<16x128xi1>, vector<16x128xf32>
    %22 = vector.extract_strided_slice %21 {offsets = [0, 0], sizes = [15, 128], strides = [1, 1]} : vector<16x128xf32> to vector<15x128xf32>
    %c1_20 = arith.constant 1 : index
    %c0_21 = arith.constant 0 : index
    %23 = vector.load %arg5[%c1_20, %c0_21] : memref<16x384xf32, #tpu.memory_space<vmem>>, vector<15x128xf32>
    tpu.vector_store %arg5[%c1_20, %c0_21], %22 {strides = array<i32>} : memref<16x384xf32, #tpu.memory_space<vmem>>, vector<15x128xf32>,
    %c0_22 = arith.constant 0 : index
    %c128_23 = arith.constant 128 : index
    %24 = vector.load %arg5[%c0_22, %c128_23] : memref<16x384xf32, #tpu.memory_space<vmem>>, vector<16x128xf32>
    tpu.vector_store %arg5[%c0_22, %c128_23], %21 {strides = array<i32>} : memref<16x384xf32, #tpu.memory_space<vmem>>, vector<16x128xf32>,
    %25 = vector.extract_strided_slice %21 {offsets = [1, 0], sizes = [15, 128], strides = [1, 1]} : vector<16x128xf32> to vector<15x128xf32>
    %c0_24 = arith.constant 0 : index
    %c256_25 = arith.constant 256 : index
    %26 = vector.load %arg5[%c0_24, %c256_25] : memref<16x384xf32, #tpu.memory_space<vmem>>, vector<15x128xf32>
    tpu.vector_store %arg5[%c0_24, %c256_25], %25 {strides = array<i32>} : memref<16x384xf32, #tpu.memory_space<vmem>>, vector<15x128xf32>,
    %c0_26 = arith.constant 0 : index
    %c0_27 = arith.constant 0 : index
    %27 = vector.load %arg5[%c0_26, %c0_27] : memref<16x384xf32, #tpu.memory_space<vmem>>, vector<16x384xf32>
    %c0_28 = arith.constant 0 : index
    %c1_29 = arith.constant 1 : index
    %c0_30 = arith.constant 0 : index
    %c0_31 = arith.constant 0 : index
    %28 = vector.load %arg2[%c0_28, %c1_29, %c0_30, %c0_31] : memref<2x2x384x128xf32, #tpu.memory_space<vmem>>, vector<1x1x384x128xf32>
    %29 = vector.shape_cast %28 : vector<1x1x384x128xf32> to vector<384x128xf32>
    %cst_32 = arith.constant dense<0.000000e+00> : vector<16x128xf32>
    %30 = tpu.matmul %27, %29, %cst_32 {dimension_numbers = #tpu.dot_dimension_numbers<[1], [0], [0], [1], [0, 0, 1, 1], [], []>} : vector<16x384xf32>, vector<384x128xf32>, vector<16x128xf32> -> vector<16x128xf32>
    %c0_33 = arith.constant 0 : index
    %c1_34 = arith.constant 1 : index
    %c0_35 = arith.constant 0 : index
    %c0_36 = arith.constant 0 : index
    %31 = vector.load %arg3[%c0_33, %c1_34, %c0_35, %c0_36] : memref<2x2x1x128xf32, #tpu.memory_space<vmem>>, vector<1x1x1x128xf32>
    %32 = vector.shape_cast %31 : vector<1x1x1x128xf32> to vector<1x128xf32>
    %33 = vector.broadcast %32 : vector<1x128xf32> to vector<16x128xf32>
    %34 = arith.addf %30, %33 : vector<16x128xf32>
    %35 = arith.addf %3, %34 : vector<16x128xf32>
    %36 = vector.extract_strided_slice %35 {offsets = [0, 0], sizes = [15, 128], strides = [1, 1]} : vector<16x128xf32> to vector<15x128xf32>
    %c1_37 = arith.constant 1 : index
    %c0_38 = arith.constant 0 : index
    %37 = vector.load %arg5[%c1_37, %c0_38] : memref<16x384xf32, #tpu.memory_space<vmem>>, vector<15x128xf32>
    tpu.vector_store %arg5[%c1_37, %c0_38], %36 {strides = array<i32>} : memref<16x384xf32, #tpu.memory_space<vmem>>, vector<15x128xf32>,
    %c0_39 = arith.constant 0 : index
    %c128_40 = arith.constant 128 : index
    %38 = vector.load %arg5[%c0_39, %c128_40] : memref<16x384xf32, #tpu.memory_space<vmem>>, vector<16x128xf32>
    tpu.vector_store %arg5[%c0_39, %c128_40], %35 {strides = array<i32>} : memref<16x384xf32, #tpu.memory_space<vmem>>, vector<16x128xf32>,
    %39 = vector.extract_strided_slice %35 {offsets = [1, 0], sizes = [15, 128], strides = [1, 1]} : vector<16x128xf32> to vector<15x128xf32>
    %c0_41 = arith.constant 0 : index
    %c256_42 = arith.constant 256 : index
    %40 = vector.load %arg5[%c0_41, %c256_42] : memref<16x384xf32, #tpu.memory_space<vmem>>, vector<15x128xf32>
    tpu.vector_store %arg5[%c0_41, %c256_42], %39 {strides = array<i32>} : memref<16x384xf32, #tpu.memory_space<vmem>>, vector<15x128xf32>,
    %c0_43 = arith.constant 0 : index
    %c0_44 = arith.constant 0 : index
    %41 = vector.load %arg5[%c0_43, %c0_44] : memref<16x384xf32, #tpu.memory_space<vmem>>, vector<16x384xf32>
    %c1_45 = arith.constant 1 : index
    %c0_46 = arith.constant 0 : index
    %c0_47 = arith.constant 0 : index
    %c0_48 = arith.constant 0 : index
    %42 = vector.load %arg2[%c1_45, %c0_46, %c0_47, %c0_48] : memref<2x2x384x128xf32, #tpu.memory_space<vmem>>, vector<1x1x384x128xf32>
    %43 = vector.shape_cast %42 : vector<1x1x384x128xf32> to vector<384x128xf32>
    %cst_49 = arith.constant dense<0.000000e+00> : vector<16x128xf32>
    %44 = tpu.matmul %41, %43, %cst_49 {dimension_numbers = #tpu.dot_dimension_numbers<[1], [0], [0], [1], [0, 0, 1, 1], [], []>} : vector<16x384xf32>, vector<384x128xf32>, vector<16x128xf32> -> vector<16x128xf32>
    %c1_50 = arith.constant 1 : index
    %c0_51 = arith.constant 0 : index
    %c0_52 = arith.constant 0 : index
    %c0_53 = arith.constant 0 : index
    %45 = vector.load %arg3[%c1_50, %c0_51, %c0_52, %c0_53] : memref<2x2x1x128xf32, #tpu.memory_space<vmem>>, vector<1x1x1x128xf32>
    %46 = vector.shape_cast %45 : vector<1x1x1x128xf32> to vector<1x128xf32>
    %47 = vector.broadcast %46 : vector<1x128xf32> to vector<16x128xf32>
    %48 = arith.addf %44, %47 : vector<16x128xf32>
    %cst_54 = arith.constant 0.000000e+00 : f32
    %49 = vector.broadcast %cst_54 : f32 to vector<16x128xf32>
    %50 = arith.cmpf ogt, %48, %49 : vector<16x128xf32>
    %cst_55 = arith.constant 0.00999999977 : f32
    %51 = vector.broadcast %cst_55 : f32 to vector<16x128xf32>
    %52 = arith.mulf %51, %48 : vector<16x128xf32>
    %53 = arith.select %50, %48, %52 : vector<16x128xi1>, vector<16x128xf32>
    %54 = vector.extract_strided_slice %53 {offsets = [0, 0], sizes = [15, 128], strides = [1, 1]} : vector<16x128xf32> to vector<15x128xf32>
    %c1_56 = arith.constant 1 : index
    %c0_57 = arith.constant 0 : index
    %55 = vector.load %arg5[%c1_56, %c0_57] : memref<16x384xf32, #tpu.memory_space<vmem>>, vector<15x128xf32>
    tpu.vector_store %arg5[%c1_56, %c0_57], %54 {strides = array<i32>} : memref<16x384xf32, #tpu.memory_space<vmem>>, vector<15x128xf32>,
    %c0_58 = arith.constant 0 : index
    %c128_59 = arith.constant 128 : index
    %56 = vector.load %arg5[%c0_58, %c128_59] : memref<16x384xf32, #tpu.memory_space<vmem>>, vector<16x128xf32>
    tpu.vector_store %arg5[%c0_58, %c128_59], %53 {strides = array<i32>} : memref<16x384xf32, #tpu.memory_space<vmem>>, vector<16x128xf32>,
    %57 = vector.extract_strided_slice %53 {offsets = [1, 0], sizes = [15, 128], strides = [1, 1]} : vector<16x128xf32> to vector<15x128xf32>
    %c0_60 = arith.constant 0 : index
    %c256_61 = arith.constant 256 : index
    %58 = vector.load %arg5[%c0_60, %c256_61] : memref<16x384xf32, #tpu.memory_space<vmem>>, vector<15x128xf32>
    tpu.vector_store %arg5[%c0_60, %c256_61], %57 {strides = array<i32>} : memref<16x384xf32, #tpu.memory_space<vmem>>, vector<15x128xf32>,
    %c0_62 = arith.constant 0 : index
    %c0_63 = arith.constant 0 : index
    %59 = vector.load %arg5[%c0_62, %c0_63] : memref<16x384xf32, #tpu.memory_space<vmem>>, vector<16x384xf32>
    %c1_64 = arith.constant 1 : index
    %c1_65 = arith.constant 1 : index
    %c0_66 = arith.constant 0 : index
    %c0_67 = arith.constant 0 : index
    %60 = vector.load %arg2[%c1_64, %c1_65, %c0_66, %c0_67] : memref<2x2x384x128xf32, #tpu.memory_space<vmem>>, vector<1x1x384x128xf32>
    %61 = vector.shape_cast %60 : vector<1x1x384x128xf32> to vector<384x128xf32>
    %cst_68 = arith.constant dense<0.000000e+00> : vector<16x128xf32>
    %62 = tpu.matmul %59, %61, %cst_68 {dimension_numbers = #tpu.dot_dimension_numbers<[1], [0], [0], [1], [0, 0, 1, 1], [], []>} : vector<16x384xf32>, vector<384x128xf32>, vector<16x128xf32> -> vector<16x128xf32>
    %c1_69 = arith.constant 1 : index
    %c1_70 = arith.constant 1 : index
    %c0_71 = arith.constant 0 : index
    %c0_72 = arith.constant 0 : index
    %63 = vector.load %arg3[%c1_69, %c1_70, %c0_71, %c0_72] : memref<2x2x1x128xf32, #tpu.memory_space<vmem>>, vector<1x1x1x128xf32>
    %64 = vector.shape_cast %63 : vector<1x1x1x128xf32> to vector<1x128xf32>
    %65 = vector.broadcast %64 : vector<1x128xf32> to vector<16x128xf32>
    %66 = arith.addf %62, %65 : vector<16x128xf32>
    %67 = arith.addf %35, %66 : vector<16x128xf32>
    %c0_73 = arith.constant 0 : index
    %c0_74 = arith.constant 0 : index
    %c0_75 = arith.constant 0 : index
    %68 = vector.load %arg4[%c0_73, %c0_74, %c0_75] : memref<1x16x128xf32, #tpu.memory_space<vmem>>, vector<1x16x128xf32>
    %69 = vector.shape_cast %68 : vector<1x16x128xf32> to vector<16x128xf32>
    %70 = vector.shape_cast %67 : vector<16x128xf32> to vector<1x16x128xf32>
    tpu.vector_store %arg4[%c0_73, %c0_74, %c0_75], %70 {strides = array<i32>} : memref<1x16x128xf32, #tpu.memory_space<vmem>>, vector<1x16x128xf32>,
    return
  }
  func.func @transform_0(%arg0: i32) -> (i32, i32, i32) {
    %c0_i32 = arith.constant 0 : i32
    %c0_i32_0 = arith.constant 0 : i32
    %c0_i32_1 = arith.constant 0 : i32
    return %arg0, %c0_i32, %c0_i32_0 : i32, i32, i32
  }
  func.func @transform_1(%arg0: i32) -> (i32, i32, i32, i32) {
    %c0_i32 = arith.constant 0 : i32
    %c0_i32_0 = arith.constant 0 : i32
    %c0_i32_1 = arith.constant 0 : i32
    %c0_i32_2 = arith.constant 0 : i32
    %c0_i32_3 = arith.constant 0 : i32
    return %c0_i32, %c0_i32_0, %c0_i32_1, %c0_i32_2 : i32, i32, i32, i32
  }
  func.func @transform_2(%arg0: i32) -> (i32, i32, i32, i32) {
    %c0_i32 = arith.constant 0 : i32
    %c0_i32_0 = arith.constant 0 : i32
    %c0_i32_1 = arith.constant 0 : i32
    %c0_i32_2 = arith.constant 0 : i32
    %c0_i32_3 = arith.constant 0 : i32
    return %c0_i32, %c0_i32_0, %c0_i32_1, %c0_i32_2 : i32, i32, i32, i32
  }
  func.func @transform_3(%arg0: i32) -> (i32, i32, i32) {
    %c0_i32 = arith.constant 0 : i32
    %c0_i32_0 = arith.constant 0 : i32
    %c0_i32_1 = arith.constant 0 : i32
    return %arg0, %c0_i32, %c0_i32_0 : i32, i32, i32
  }
}

</mosaic_0001>

<llo_original>
// kernel: resnet_forward_pallas.1
$region0: #{resnet_forward_pallas.1}
  #allocation0 [shape = 'u32[]', space=smem, size = 0x4, offset = 0x4, fixed_abs, tag = 'smem constant byte address 0x4 - core index']
  #allocation1 [shape = 'u32[144,128]{1,0:T(1,128)}', space=vmem, size = 0x12000, scoped, tag = 'internal scratch']
  #allocation2 [shape = 'f32[16,384]{1,0:T(8,128)}', space=vmem, size = 0x6000, scoped, tag = 'scratch operand']
  %s0 = inlined_call_operand.vmem [shape: f32[2,16,128], index: 0, kind: input, shape index: {}]
  %s1 = inlined_call_operand.hbm [shape: f32[2,2,384,128], index: 1, kind: input, shape index: {}]
  %s2 = inlined_call_operand.vmem [shape: f32[2,2,1,128], index: 2, kind: input, shape index: {}]
  %s3 = inlined_call_operand.vmem [shape: f32[2,16,128], index: 3, kind: output, shape index: {}]
  %s4 = sld [smem:[#allocation0]]
  $region49: #{resnet_forward_pallas.1} parent=0
    _
  %s6 = ssub.s32 1, %s4
  %s7 = scalar_select 0, %s6, %s4
  $region1: #{resnet_forward_pallas.1} parent=0
    #allocation3 [shape = 'u8[786432]{0}', space=vmem, size = 0xc0000, scoped, tag = 'input window, operand 1, single buffered']
    #allocation4 [shape = 's32[2]{0}', space=sflag, size = 0x8, scoped, tag = 'scoped memory for resnet_forward_pallas.1']
    %8 = vsyncpa [#allocation4], 0
    loop: start=0, step=1, limit=4
    $region2: #{resnet_forward_pallas.1} parent=1 // loop_pre_header
      _
    $region3: #{resnet_forward_pallas.1} parent=1 // loop_header
      %s10 = sphi 0, %s14
      %p11 = scmp.ge.s32.totalorder %s10, 4
      %s20 = sphi 0, %s22
      %s23 = sphi 0, %s20
      %s24 = sphi 0, %s23
      %s40 = sphi 0, %s24
      %s44 = sphi 0, %s44
      %s46 = sphi 0, %s44
      %s47 = sphi 0, %s46
      %s61 = sphi 0, %s47
      %s65 = sphi 0, %s65
      %s67 = sphi 0, %s65
      %s68 = sphi 0, %s67
      %s82 = sphi 0, %s68
      %s88 = sphi 0, %s90
      %s91 = sphi 0, %s88
      %s92 = sphi 0, %s91
      %s108 = sphi 0, %s92
    $region4: #{resnet_forward_pallas.1} parent=1 // loop_header_branch
      %13 = sbr.rel (%p11) target = $region8
    $region5: #{resnet_forward_pallas.1} parent=1 // loop_body
      %s15 = ssub.s32 %s10, 1
      %s16 = ssub.s32 %s10, 2
      %s17 = sadd.s32 %s10, 1
      %s18 = ssub.s32 %s10, %s17
      %p19 = scmp.eq.s32.totalorder %s18, 0
      %s21 = sadd.s32 %s20, 1
      %s22 = scalar_select %p19, %s20, %s21
      %p25 = pneg %p19
      %p26 = scmp.eq.s32.totalorder %s10, 1
      %p27 = por %p25, %p26
      %p28 = scmp.ne.s32.totalorder %s20, %s23
      %p29 = scmp.eq.s32.totalorder %s10, 0
      %p30 = por %p28, %p29
      %p31 = scmp.ne.s32.totalorder %s20, %s23
      %p32 = scmp.eq.s32.totalorder %s15, 1
      %p33 = por %p31, %p32
      %p34 = scmp.ne.s32.totalorder %s23, %s24
      %p35 = scmp.eq.s32.totalorder %s15, 0
      %p36 = por %p34, %p35
      %p37 = scmp.ne.s32.totalorder %s23, %s24
      %p38 = scmp.eq.s32.totalorder %s16, 1
      %p39 = por %p37, %p38
      %p41 = scmp.ne.s32.totalorder %s24, %s40
      %p42 = scmp.eq.s32.totalorder %s16, 0
      %p43 = por %p41, %p42
      %s45 = sadd.s32 %s44, 1
      %p48 = scmp.eq.s32.totalorder %s10, 1
      %p49 = scmp.ne.s32.totalorder %s44, %s46
      %p50 = scmp.eq.s32.totalorder %s10, 0
      %p51 = por %p49, %p50
      %p52 = scmp.ne.s32.totalorder %s44, %s46
      %p53 = scmp.eq.s32.totalorder %s15, 1
      %p54 = por %p52, %p53
      %p55 = scmp.ne.s32.totalorder %s46, %s47
      %p56 = scmp.eq.s32.totalorder %s15, 0
      %p57 = por %p55, %p56
      %p58 = scmp.ne.s32.totalorder %s46, %s47
      %p59 = scmp.eq.s32.totalorder %s16, 1
      %p60 = por %p58, %p59
      %p62 = scmp.ne.s32.totalorder %s47, %s61
      %p63 = scmp.eq.s32.totalorder %s16, 0
      %p64 = por %p62, %p63
      %s66 = sadd.s32 %s65, 1
      %p69 = scmp.eq.s32.totalorder %s10, 1
      %p70 = scmp.ne.s32.totalorder %s65, %s67
      %p71 = scmp.eq.s32.totalorder %s10, 0
      %p72 = por %p70, %p71
      %p73 = scmp.ne.s32.totalorder %s65, %s67
      %p74 = scmp.eq.s32.totalorder %s15, 1
      %p75 = por %p73, %p74
      %p76 = scmp.ne.s32.totalorder %s67, %s68
      %p77 = scmp.eq.s32.totalorder %s15, 0
      %p78 = por %p76, %p77
      %p79 = scmp.ne.s32.totalorder %s67, %s68
      %p80 = scmp.eq.s32.totalorder %s16, 1
      %p81 = por %p79, %p80
      %p83 = scmp.ne.s32.totalorder %s68, %s82
      %p84 = scmp.eq.s32.totalorder %s16, 0
      %p85 = por %p83, %p84
      %s86 = ssub.s32 %s10, %s17
      %p87 = scmp.eq.s32.totalorder %s86, 0
      %s89 = sadd.s32 %s88, 1
      %s90 = scalar_select %p87, %s88, %s89
      %p93 = pneg %p87
      %p94 = scmp.eq.s32.totalorder %s10, 1
      %p95 = por %p93, %p94
      %p96 = scmp.ne.s32.totalorder %s88, %s91
      %p97 = scmp.eq.s32.totalorder %s10, 0
      %p98 = por %p96, %p97
      %p99 = scmp.ne.s32.totalorder %s88, %s91
      %p100 = scmp.eq.s32.totalorder %s15, 1
      %p101 = por %p99, %p100
      %p102 = scmp.ne.s32.totalorder %s91, %s92
      %p103 = scmp.eq.s32.totalorder %s15, 0
      %p104 = por %p102, %p103
      %p105 = scmp.ne.s32.totalorder %s91, %s92
      %p106 = scmp.eq.s32.totalorder %s16, 1
      %p107 = por %p105, %p106
      %p109 = scmp.ne.s32.totalorder %s92, %s108
      %p110 = scmp.eq.s32.totalorder %s16, 0
      %p111 = por %p109, %p110
      %p112 = scmp.le.s32.totalorder 1, %s10
      %p113 = scmp.lt.s32.totalorder %s10, 3
      %p114 = pnand %p112, %p113
      %p115 = pneg %p114
      // Predicated region
      $region9: #{resnet_forward_pallas.1} parent=5 // pred_check
        _
      $region10: #{resnet_forward_pallas.1} parent=5 // pred_check_branch
        %117 = sbr.rel (%p114) target = $region12
      $region11: #{resnet_forward_pallas.1} parent=5 // pred_region
        %s118 = ssub.s32 %s10, 1
        // Predicated region
        $region13: #{resnet_forward_pallas.1} parent=11 // pred_check
          %p119 = pneg %p57
        $region14: #{resnet_forward_pallas.1} parent=11 // pred_check_branch
          %121 = sbr.rel (%p119) target = $region16
        $region15: #{resnet_forward_pallas.1} parent=11 // pred_region
          %s123 = ssub.s32 24576, 24576
          %124 = vsyncadd [#allocation4], %s123
          %s125 = sshll.u32 [#allocation3], 4
          %s126 = int_to_ptr.vmem [resolvable:$true] %s125
          %131 = dma.hbm_to_vmem [thread:$0]  %s1, 24576, %s126, [#allocation4], 128, 128, 8
        $region16: #{resnet_forward_pallas.1} parent=11 // pred_fallthru
          _
        // Predicated region
        $region17: #{resnet_forward_pallas.1} parent=11 // pred_check
          %p132 = pneg %p78
        $region18: #{resnet_forward_pallas.1} parent=11 // pred_check_branch
          %134 = sbr.rel (%p132) target = $region20
        $region19: #{resnet_forward_pallas.1} parent=11 // pred_region
          _
        $region20: #{resnet_forward_pallas.1} parent=11 // pred_fallthru
          _
      $region12: #{resnet_forward_pallas.1} parent=5 // pred_fallthru
        _
      %p135 = scmp.lt.s32.totalorder %s10, 2
      // Predicated region
      $region21: #{resnet_forward_pallas.1} parent=5 // pred_check
        %p136 = pneg %p135
      $region22: #{resnet_forward_pallas.1} parent=5 // pred_check_branch
        %138 = sbr.rel (%p136) target = $region24
      $region23: #{resnet_forward_pallas.1} parent=5 // pred_region
        // Predicated region
        $region25: #{resnet_forward_pallas.1} parent=23 // pred_check
          %p139 = pneg %p30
        $region26: #{resnet_forward_pallas.1} parent=23 // pred_check_branch
          %141 = sbr.rel (%p139) target = $region28
        $region27: #{resnet_forward_pallas.1} parent=23 // pred_region
          %p142 = scmp.lt.s32.totalorder %s10, 1
          %s143 = scalar_select %p142, %s10, 1
          %s144 = smul.addr %s143, 2
          %s145 = smul.addr %s144, 8
          %s146 = scalar_lea.vmem %s0, %s145
        $region28: #{resnet_forward_pallas.1} parent=23 // pred_fallthru
          _
      $region24: #{resnet_forward_pallas.1} parent=5 // pred_fallthru
        _
      %p147 = scmp.le.s32.totalorder 1, %s10
      %p148 = scmp.lt.s32.totalorder %s10, 3
      %p149 = pnand %p147, %p148
      %p150 = pneg %p149
      // Predicated region
      $region29: #{resnet_forward_pallas.1} parent=5 // pred_check
        _
      $region30: #{resnet_forward_pallas.1} parent=5 // pred_check_branch
        %152 = sbr.rel (%p149) target = $region32
      $region31: #{resnet_forward_pallas.1} parent=5 // pred_region
        %s153 = ssub.s32 %s10, 1
        // Predicated region
        $region33: #{resnet_forward_pallas.1} parent=31 // pred_check
          %p154 = pneg %p57
        $region34: #{resnet_forward_pallas.1} parent=31 // pred_check_branch
          %156 = sbr.rel (%p154) target = $region36
        $region35: #{resnet_forward_pallas.1} parent=31 // pred_region
          %157 = dma.done [#allocation4], 24576
        $region36: #{resnet_forward_pallas.1} parent=31 // pred_fallthru
          _
        %p158 = scmp.lt.s32.totalorder %s15, 1
        %s159 = scalar_select %p158, %s15, 1
        %s160 = smul.addr %s159, 2
        %s161 = smul.addr %s160, 8
        %s162 = scalar_lea.vmem %s0, %s161
        %p163 = pneg %p36
        %p164 = pneg %p33
        %p165 = pneg %p57
        %p166 = pneg %p54
        %p167 = pneg %p78
        %p168 = pneg %p75
        %p169 = pneg %p104
        %p170 = pneg %p101
        %p171 = scmp.lt.s32.totalorder %s15, 1
        %s172 = scalar_select %p171, %s15, 1
        %s173 = smul.addr %s172, 2
        %s174 = smul.addr %s173, 8
        %s175 = scalar_lea.vmem %s3, %s174
        %p176 = scmp.lt.s32.totalorder %s15, 1
        %s177 = scalar_select %p176, %s15, 1
        %s178 = smul.addr %s177, 2
        %s179 = smul.addr %s178, 8
        %s180 = scalar_lea.vmem %s0, %s179
        %p181 = scmp.lt.s32.totalorder %s15, 1
        %s182 = scalar_select %p181, %s15, 1
        %s183 = smul.addr %s182, 2
        %s184 = smul.addr %s183, 8
        %s185 = scalar_lea.vmem %s3, %s184
        %186 = vst [vmem:[#allocation2] sm:$0xff] 0.0
        %187 = vst [vmem:[#allocation2 + $0x8] sm:$0xff] 0.0
        %188 = vst [vmem:[#allocation2 + $0x10] sm:$0xff] 0.0
        %189 = vst [vmem:[#allocation2 + $0x18] sm:$0xff] 0.0
        %190 = vst [vmem:[#allocation2 + $0x20] sm:$0xff] 0.0
        %191 = vst [vmem:[#allocation2 + $0x28] sm:$0xff] 0.0
        %v192 = vld [vmem:[%s180] sm:$0xff]
        %v193 = vld [vmem:[%s180 + $0x8] sm:$0xff]
        %vm196 = vcmask 1040384
        %v197 = vrot.slane %v192, 7
        %v198 = vrot.slane %v193, 7
        %v199 = vsel %vm196, %v197, %v198
        %202 = vst [vmem:[#allocation2] sm:$0xfe] %v197
        %203 = vst [vmem:[#allocation2 + $0x18] sm:$0xff] %v199
        %204 = vst [vmem:[#allocation2 + $0x8] sm:$0xff] %v192
        %205 = vst [vmem:[#allocation2 + $0x20] sm:$0xff] %v193
        %vm206 = vcmask 1046528
        %v207 = vrot.slane %v192, 1
        %v208 = vrot.slane %v193, 1
        %v209 = vsel %vm206, %v207, %v208
        %212 = vst [vmem:[#allocation2 + $0x10] sm:$0xff] %v209
        %213 = vst [vmem:[#allocation2 + $0x28] sm:$0x7f] %v208
        %v214 = vld [vmem:[#allocation2] sm:$0xff]
        %v215 = vld [vmem:[#allocation2 + $0x8] sm:$0xff]
        %v216 = vld [vmem:[#allocation2 + $0x10] sm:$0xff]
        %v217 = vld [vmem:[#allocation2 + $0x18] sm:$0xff]
        %v218 = vld [vmem:[#allocation2 + $0x20] sm:$0xff]
        %v219 = vld [vmem:[#allocation2 + $0x28] sm:$0xff]
        %v220 = vld [vmem:[#allocation3] sm:$0xff]
        %v221 = vld [vmem:[#allocation3 + $0x8] sm:$0xff]
        %v222 = vld [vmem:[#allocation3 + $0x10] sm:$0xff]
        %v223 = vld [vmem:[#allocation3 + $0x18] sm:$0xff]
        %v224 = vld [vmem:[#allocation3 + $0x20] sm:$0xff]
        %v225 = vld [vmem:[#allocation3 + $0x28] sm:$0xff]
        %v226 = vld [vmem:[#allocation3 + $0x30] sm:$0xff]
        %v227 = vld [vmem:[#allocation3 + $0x38] sm:$0xff]
        %v228 = vld [vmem:[#allocation3 + $0x40] sm:$0xff]
        %v229 = vld [vmem:[#allocation3 + $0x48] sm:$0xff]
        %v230 = vld [vmem:[#allocation3 + $0x50] sm:$0xff]
        %v231 = vld [vmem:[#allocation3 + $0x58] sm:$0xff]
        %v232 = vld [vmem:[#allocation3 + $0x60] sm:$0xff]
        %v233 = vld [vmem:[#allocation3 + $0x68] sm:$0xff]
        %v234 = vld [vmem:[#allocation3 + $0x70] sm:$0xff]
        %v235 = vld [vmem:[#allocation3 + $0x78] sm:$0xff]
        %v236 = vld [vmem:[#allocation3 + $0x80] sm:$0xff]
        %v237 = vld [vmem:[#allocation3 + $0x88] sm:$0xff]
        %v238 = vld [vmem:[#allocation3 + $0x90] sm:$0xff]
        %v239 = vld [vmem:[#allocation3 + $0x98] sm:$0xff]
        %v240 = vld [vmem:[#allocation3 + $0xa0] sm:$0xff]
        %v241 = vld [vmem:[#allocation3 + $0xa8] sm:$0xff]
        %v242 = vld [vmem:[#allocation3 + $0xb0] sm:$0xff]
        %v243 = vld [vmem:[#allocation3 + $0xb8] sm:$0xff]
        %v244 = vld [vmem:[#allocation3 + $0xc0] sm:$0xff]
        %v245 = vld [vmem:[#allocation3 + $0xc8] sm:$0xff]
        %v246 = vld [vmem:[#allocation3 + $0xd0] sm:$0xff]
        %v247 = vld [vmem:[#allocation3 + $0xd8] sm:$0xff]
        %v248 = vld [vmem:[#allocation3 + $0xe0] sm:$0xff]
        %v249 = vld [vmem:[#allocation3 + $0xe8] sm:$0xff]
        %v250 = vld [vmem:[#allocation3 + $0xf0] sm:$0xff]
        %v251 = vld [vmem:[#allocation3 + $0xf8] sm:$0xff]
        %v252 = vld [vmem:[#allocation3 + $0x100] sm:$0xff]
        %v253 = vld [vmem:[#allocation3 + $0x108] sm:$0xff]
        %v254 = vld [vmem:[#allocation3 + $0x110] sm:$0xff]
        %v255 = vld [vmem:[#allocation3 + $0x118] sm:$0xff]
        %v256 = vld [vmem:[#allocation3 + $0x120] sm:$0xff]
        %v257 = vld [vmem:[#allocation3 + $0x128] sm:$0xff]
        %v258 = vld [vmem:[#allocation3 + $0x130] sm:$0xff]
        %v259 = vld [vmem:[#allocation3 + $0x138] sm:$0xff]
        %v260 = vld [vmem:[#allocation3 + $0x140] sm:$0xff]
        %v261 = vld [vmem:[#allocation3 + $0x148] sm:$0xff]
        %v262 = vld [vmem:[#allocation3 + $0x150] sm:$0xff]
        %v263 = vld [vmem:[#allocation3 + $0x158] sm:$0xff]
        %v264 = vld [vmem:[#allocation3 + $0x160] sm:$0xff]
        %v265 = vld [vmem:[#allocation3 + $0x168] sm:$0xff]
        %v266 = vld [vmem:[#allocation3 + $0x170] sm:$0xff]
        %v267 = vld [vmem:[#allocation3 + $0x178] sm:$0xff]
        %v268 = vld [vmem:[%s2] sm:$0x1]
        %v270 = vlaneseq
        %v271 = vshrl.u32 %v270, 7
        %v272 = vsub.s32 0, %v271
        %v273 = vrot.slane %v268, %v272
        %275 = vmatprep.subr.mxu0 0.0
        %276 = vmatpush1.msra.mxu0 %v235
        %277 = vmatprep.subr.mxu0 0.0
        %278 = vmatpush1.msra.mxu0 %v234
        %279 = vmatprep.subr.mxu0 0.0
        %280 = vmatpush1.msra.mxu0 %v233
        %281 = vmatprep.subr.mxu0 0.0
        %282 = vmatpush1.msra.mxu0 %v232
        %283 = vmatprep.subr.mxu0 0.0
        %284 = vmatpush1.msra.mxu0 %v231
        %285 = vmatprep.subr.mxu0 0.0
        %286 = vmatpush1.msra.mxu0 %v230
        %287 = vmatprep.subr.mxu0 0.0
        %288 = vmatpush1.msra.mxu0 %v229
        %289 = vmatprep.subr.mxu0 0.0
        %290 = vmatpush1.msra.mxu0 %v228
        %291 = vmatprep.subr.mxu0 0.0
        %292 = vmatpush1.msra.mxu0 %v227
        %293 = vmatprep.subr.mxu0 0.0
        %294 = vmatpush1.msra.mxu0 %v226
        %295 = vmatprep.subr.mxu0 0.0
        %296 = vmatpush1.msra.mxu0 %v225
        %297 = vmatprep.subr.mxu0 0.0
        %298 = vmatpush1.msra.mxu0 %v224
        %299 = vmatprep.subr.mxu0 0.0
        %300 = vmatpush1.msra.mxu0 %v223
        %301 = vmatprep.subr.mxu0 0.0
        %302 = vmatpush1.msra.mxu0 %v222
        %303 = vmatprep.subr.mxu0 0.0
        %304 = vmatpush1.msra.mxu0 %v221
        %305 = vmatprep.subr.mxu0 0.0
        %306 = vmatpush1.msra.mxu0 %v220
        %307 = vmatprep.subr.mxu0 0.0
        %308 = vmatpush2.msra.mxu0 %v251
        %309 = vmatprep.subr.mxu0 0.0
        %310 = vmatpush2.msra.mxu0 %v250
        %311 = vmatprep.subr.mxu0 0.0
        %312 = vmatpush2.msra.mxu0 %v249
        %313 = vmatprep.subr.mxu0 0.0
        %314 = vmatpush2.msra.mxu0 %v248
        %315 = vmatprep.subr.mxu0 0.0
        %316 = vmatpush2.msra.mxu0 %v247
        %317 = vmatprep.subr.mxu0 0.0
        %318 = vmatpush2.msra.mxu0 %v246
        %319 = vmatprep.subr.mxu0 0.0
        %320 = vmatpush2.msra.mxu0 %v245
        %321 = vmatprep.subr.mxu0 0.0
        %322 = vmatpush2.msra.mxu0 %v244
        %323 = vmatprep.subr.mxu0 0.0
        %324 = vmatpush2.msra.mxu0 %v243
        %325 = vmatprep.subr.mxu0 0.0
        %326 = vmatpush2.msra.mxu0 %v242
        %327 = vmatprep.subr.mxu0 0.0
        %328 = vmatpush2.msra.mxu0 %v241
        %329 = vmatprep.subr.mxu0 0.0
        %330 = vmatpush2.msra.mxu0 %v240
        %331 = vmatprep.subr.mxu0 0.0
        %332 = vmatpush2.msra.mxu0 %v239
        %333 = vmatprep.subr.mxu0 0.0
        %334 = vmatpush2.msra.mxu0 %v238
        %335 = vmatprep.subr.mxu0 0.0
        %336 = vmatpush2.msra.mxu0 %v237
        %337 = vmatprep.subr.mxu0 0.0
        %338 = vmatpush2.msra.mxu0 %v236
        %339 = vmatprep.mubr.f32.mxu0 %v215
        %340 = vmatmul.mubr.f32.gmra.mxu0 %v214
        %v341 = vpop.f32.mrf.mxu0
        %v342 = vadd.f32 %v273, %v341
        %v343 = vpop.f32.mrf.mxu0
        %344 = vmatprep.mubr.f32.mxu0 %v218
        %345 = vmatmul.mubr.f32.gmra.mxu0 %v217
        %v346 = vpop.f32.mrf.mxu0
        %v347 = vadd.f32 %v273, %v346
        %v348 = vpop.f32.mrf.mxu0
        %349 = vdwg.mxu0
        %350 = vmatprep.subr.mxu0 0.0
        %351 = vmatpush1.msra.mxu0 %v267
        %352 = vmatprep.subr.mxu0 0.0
        %353 = vmatpush1.msra.mxu0 %v266
        %354 = vmatprep.subr.mxu0 0.0
        %355 = vmatpush1.msra.mxu0 %v265
        %356 = vmatprep.subr.mxu0 0.0
        %357 = vmatpush1.msra.mxu0 %v264
        %358 = vmatprep.subr.mxu0 0.0
        %359 = vmatpush1.msra.mxu0 %v263
        %360 = vmatprep.subr.mxu0 0.0
        %361 = vmatpush1.msra.mxu0 %v262
        %362 = vmatprep.subr.mxu0 0.0
        %363 = vmatpush1.msra.mxu0 %v261
        %364 = vmatprep.subr.mxu0 0.0
        %365 = vmatpush1.msra.mxu0 %v260
        %366 = vmatprep.subr.mxu0 0.0
        %367 = vmatpush1.msra.mxu0 %v259
        %368 = vmatprep.subr.mxu0 0.0
        %369 = vmatpush1.msra.mxu0 %v258
        %370 = vmatprep.subr.mxu0 0.0
        %371 = vmatpush1.msra.mxu0 %v257
        %372 = vmatprep.subr.mxu0 0.0
        %373 = vmatpush1.msra.mxu0 %v256
        %374 = vmatprep.subr.mxu0 0.0
        %375 = vmatpush1.msra.mxu0 %v255
        %376 = vmatprep.subr.mxu0 0.0
        %377 = vmatpush1.msra.mxu0 %v254
        %378 = vmatprep.subr.mxu0 0.0
        %379 = vmatpush1.msra.mxu0 %v253
        %380 = vmatprep.subr.mxu0 0.0
        %381 = vmatpush1.msra.mxu0 %v252
        %382 = vmatprep.subr.mxu0 0.0
        %383 = vmatpush2.msra.mxu0 0.0
        %384 = vmatprep.subr.mxu0 0.0
        %385 = vmatpush2.msra.mxu0 0.0
        %386 = vmatprep.subr.mxu0 0.0
        %387 = vmatpush2.msra.mxu0 0.0
        %388 = vmatprep.subr.mxu0 0.0
        %389 = vmatpush2.msra.mxu0 0.0
        %390 = vmatprep.subr.mxu0 0.0
        %391 = vmatpush2.msra.mxu0 0.0
        %392 = vmatprep.subr.mxu0 0.0
        %393 = vmatpush2.msra.mxu0 0.0
        %394 = vmatprep.subr.mxu0 0.0
        %395 = vmatpush2.msra.mxu0 0.0
        %396 = vmatprep.subr.mxu0 0.0
        %397 = vmatpush2.msra.mxu0 0.0
        %398 = vmatprep.subr.mxu0 0.0
        %399 = vmatpush2.msra.mxu0 0.0
        %400 = vmatprep.subr.mxu0 0.0
        %401 = vmatpush2.msra.mxu0 0.0
        %402 = vmatprep.subr.mxu0 0.0
        %403 = vmatpush2.msra.mxu0 0.0
        %404 = vmatprep.subr.mxu0 0.0
        %405 = vmatpush2.msra.mxu0 0.0
        %406 = vmatprep.subr.mxu0 0.0
        %407 = vmatpush2.msra.mxu0 0.0
        %408 = vmatprep.subr.mxu0 0.0
        %409 = vmatpush2.msra.mxu0 0.0
        %410 = vmatprep.subr.mxu0 0.0
        %411 = vmatpush2.msra.mxu0 0.0
        %412 = vmatprep.subr.mxu0 0.0
        %413 = vmatpush2.msra.mxu0 0.0
        %414 = vmatprep.mubr.f32.mxu0 0.0
        %415 = vmatmul.mubr.f32.gmra.mxu0 %v216
        %v416 = vpop.f32.mrf.mxu0
        %v417 = vadd.f32 %v342, %v416
        %v418 = vpop.f32.mrf.mxu0
        %419 = vmatprep.mubr.f32.mxu0 0.0
        %420 = vmatmul.mubr.f32.gmra.mxu0 %v219
        %v421 = vpop.f32.mrf.mxu0
        %v422 = vadd.f32 %v347, %v421
        %v423 = vpop.f32.mrf.mxu0
        %424 = vdwg.mxu0
        %vm425 = vcmp.gt.f32.partialorder %v417, 0.0
        %vm426 = vcmp.gt.f32.partialorder %v422, 0.0
        %v427 = vmul.f32 %v417, 0.01
        %v428 = vmul.f32 %v422, 0.01
        %v429 = vsel %vm425, %v417, %v427
        %v430 = vsel %vm426, %v422, %v428
        %v433 = vrot.slane %v429, 7
        %v434 = vrot.slane %v430, 7
        %v435 = vsel %vm196, %v433, %v434
        %438 = vst [vmem:[#allocation2] sm:$0xfe] %v433
        %439 = vst [vmem:[#allocation2 + $0x18] sm:$0xff] %v435
        %440 = vst [vmem:[#allocation2 + $0x8] sm:$0xff] %v429
        %441 = vst [vmem:[#allocation2 + $0x20] sm:$0xff] %v430
        %v442 = vrot.slane %v429, 1
        %v443 = vrot.slane %v430, 1
        %v444 = vsel %vm206, %v442, %v443
        %447 = vst [vmem:[#allocation2 + $0x10] sm:$0xff] %v444
        %448 = vst [vmem:[#allocation2 + $0x28] sm:$0x7f] %v443
        %v449 = vld [vmem:[#allocation2] sm:$0xff]
        %v450 = vld [vmem:[#allocation2 + $0x8] sm:$0xff]
        %v451 = vld [vmem:[#allocation2 + $0x10] sm:$0xff]
        %v452 = vld [vmem:[#allocation2 + $0x18] sm:$0xff]
        %v453 = vld [vmem:[#allocation2 + $0x20] sm:$0xff]
        %v454 = vld [vmem:[#allocation2 + $0x28] sm:$0xff]
        %s455 = scalar_lea.vmem [#allocation3], 384
        %v456 = vld [vmem:[%s455] sm:$0xff]
        %v457 = vld [vmem:[%s455 + $0x8] sm:$0xff]
        %v458 = vld [vmem:[%s455 + $0x10] sm:$0xff]
        %v459 = vld [vmem:[%s455 + $0x18] sm:$0xff]
        %v460 = vld [vmem:[%s455 + $0x20] sm:$0xff]
        %v461 = vld [vmem:[%s455 + $0x28] sm:$0xff]
        %v462 = vld [vmem:[%s455 + $0x30] sm:$0xff]
        %v463 = vld [vmem:[%s455 + $0x38] sm:$0xff]
        %v464 = vld [vmem:[%s455 + $0x40] sm:$0xff]
        %v465 = vld [vmem:[%s455 + $0x48] sm:$0xff]
        %v466 = vld [vmem:[%s455 + $0x50] sm:$0xff]
        %v467 = vld [vmem:[%s455 + $0x58] sm:$0xff]
        %v468 = vld [vmem:[%s455 + $0x60] sm:$0xff]
        %v469 = vld [vmem:[%s455 + $0x68] sm:$0xff]
        %v470 = vld [vmem:[%s455 + $0x70] sm:$0xff]
        %v471 = vld [vmem:[%s455 + $0x78] sm:$0xff]
        %v472 = vld [vmem:[%s455 + $0x80] sm:$0xff]
        %v473 = vld [vmem:[%s455 + $0x88] sm:$0xff]
        %v474 = vld [vmem:[%s455 + $0x90] sm:$0xff]
        %v475 = vld [vmem:[%s455 + $0x98] sm:$0xff]
        %v476 = vld [vmem:[%s455 + $0xa0] sm:$0xff]
        %v477 = vld [vmem:[%s455 + $0xa8] sm:$0xff]
        %v478 = vld [vmem:[%s455 + $0xb0] sm:$0xff]
        %v479 = vld [vmem:[%s455 + $0xb8] sm:$0xff]
        %v480 = vld [vmem:[%s455 + $0xc0] sm:$0xff]
        %v481 = vld [vmem:[%s455 + $0xc8] sm:$0xff]
        %v482 = vld [vmem:[%s455 + $0xd0] sm:$0xff]
        %v483 = vld [vmem:[%s455 + $0xd8] sm:$0xff]
        %v484 = vld [vmem:[%s455 + $0xe0] sm:$0xff]
        %v485 = vld [vmem:[%s455 + $0xe8] sm:$0xff]
        %v486 = vld [vmem:[%s455 + $0xf0] sm:$0xff]
        %v487 = vld [vmem:[%s455 + $0xf8] sm:$0xff]
        %v488 = vld [vmem:[%s455 + $0x100] sm:$0xff]
        %v489 = vld [vmem:[%s455 + $0x108] sm:$0xff]
        %v490 = vld [vmem:[%s455 + $0x110] sm:$0xff]
        %v491 = vld [vmem:[%s455 + $0x118] sm:$0xff]
        %v492 = vld [vmem:[%s455 + $0x120] sm:$0xff]
        %v493 = vld [vmem:[%s455 + $0x128] sm:$0xff]
        %v494 = vld [vmem:[%s455 + $0x130] sm:$0xff]
        %v495 = vld [vmem:[%s455 + $0x138] sm:$0xff]
        %v496 = vld [vmem:[%s455 + $0x140] sm:$0xff]
        %v497 = vld [vmem:[%s455 + $0x148] sm:$0xff]
        %v498 = vld [vmem:[%s455 + $0x150] sm:$0xff]
        %v499 = vld [vmem:[%s455 + $0x158] sm:$0xff]
        %v500 = vld [vmem:[%s455 + $0x160] sm:$0xff]
        %v501 = vld [vmem:[%s455 + $0x168] sm:$0xff]
        %v502 = vld [vmem:[%s455 + $0x170] sm:$0xff]
        %v503 = vld [vmem:[%s455 + $0x178] sm:$0xff]
        %s504 = scalar_lea.vmem %s2, 1
        %v505 = vld [vmem:[%s504] sm:$0x1]
        %v507 = vlaneseq
        %v508 = vshrl.u32 %v507, 7
        %v509 = vsub.s32 0, %v508
        %v510 = vrot.slane %v505, %v509
        %512 = vmatprep.subr.mxu0 0.0
        %513 = vmatpush1.msra.mxu0 %v471
        %514 = vmatprep.subr.mxu0 0.0
        %515 = vmatpush1.msra.mxu0 %v470
        %516 = vmatprep.subr.mxu0 0.0
        %517 = vmatpush1.msra.mxu0 %v469
        %518 = vmatprep.subr.mxu0 0.0
        %519 = vmatpush1.msra.mxu0 %v468
        %520 = vmatprep.subr.mxu0 0.0
        %521 = vmatpush1.msra.mxu0 %v467
        %522 = vmatprep.subr.mxu0 0.0
        %523 = vmatpush1.msra.mxu0 %v466
        %524 = vmatprep.subr.mxu0 0.0
        %525 = vmatpush1.msra.mxu0 %v465
        %526 = vmatprep.subr.mxu0 0.0
        %527 = vmatpush1.msra.mxu0 %v464
        %528 = vmatprep.subr.mxu0 0.0
        %529 = vmatpush1.msra.mxu0 %v463
        %530 = vmatprep.subr.mxu0 0.0
        %531 = vmatpush1.msra.mxu0 %v462
        %532 = vmatprep.subr.mxu0 0.0
        %533 = vmatpush1.msra.mxu0 %v461
        %534 = vmatprep.subr.mxu0 0.0
        %535 = vmatpush1.msra.mxu0 %v460
        %536 = vmatprep.subr.mxu0 0.0
        %537 = vmatpush1.msra.mxu0 %v459
        %538 = vmatprep.subr.mxu0 0.0
        %539 = vmatpush1.msra.mxu0 %v458
        %540 = vmatprep.subr.mxu0 0.0
        %541 = vmatpush1.msra.mxu0 %v457
        %542 = vmatprep.subr.mxu0 0.0
        %543 = vmatpush1.msra.mxu0 %v456
        %544 = vmatprep.subr.mxu0 0.0
        %545 = vmatpush2.msra.mxu0 %v487
        %546 = vmatprep.subr.mxu0 0.0
        %547 = vmatpush2.msra.mxu0 %v486
        %548 = vmatprep.subr.mxu0 0.0
        %549 = vmatpush2.msra.mxu0 %v485
        %550 = vmatprep.subr.mxu0 0.0
        %551 = vmatpush2.msra.mxu0 %v484
        %552 = vmatprep.subr.mxu0 0.0
        %553 = vmatpush2.msra.mxu0 %v483
        %554 = vmatprep.subr.mxu0 0.0
        %555 = vmatpush2.msra.mxu0 %v482
        %556 = vmatprep.subr.mxu0 0.0
        %557 = vmatpush2.msra.mxu0 %v481
        %558 = vmatprep.subr.mxu0 0.0
        %559 = vmatpush2.msra.mxu0 %v480
        %560 = vmatprep.subr.mxu0 0.0
        %561 = vmatpush2.msra.mxu0 %v479
        %562 = vmatprep.subr.mxu0 0.0
        %563 = vmatpush2.msra.mxu0 %v478
        %564 = vmatprep.subr.mxu0 0.0
        %565 = vmatpush2.msra.mxu0 %v477
        %566 = vmatprep.subr.mxu0 0.0
        %567 = vmatpush2.msra.mxu0 %v476
        %568 = vmatprep.subr.mxu0 0.0
        %569 = vmatpush2.msra.mxu0 %v475
        %570 = vmatprep.subr.mxu0 0.0
        %571 = vmatpush2.msra.mxu0 %v474
        %572 = vmatprep.subr.mxu0 0.0
        %573 = vmatpush2.msra.mxu0 %v473
        %574 = vmatprep.subr.mxu0 0.0
        %575 = vmatpush2.msra.mxu0 %v472
        %576 = vmatprep.mubr.f32.mxu0 %v450
        %577 = vmatmul.mubr.f32.gmra.mxu0 %v449
        %v578 = vpop.f32.mrf.mxu0
        %v579 = vadd.f32 %v510, %v578
        %v580 = vpop.f32.mrf.mxu0
        %581 = vmatprep.mubr.f32.mxu0 %v453
        %582 = vmatmul.mubr.f32.gmra.mxu0 %v452
        %v583 = vpop.f32.mrf.mxu0
        %v584 = vadd.f32 %v510, %v583
        %v585 = vpop.f32.mrf.mxu0
        %586 = vdwg.mxu0
        %587 = vmatprep.subr.mxu0 0.0
        %588 = vmatpush1.msra.mxu0 %v503
        %589 = vmatprep.subr.mxu0 0.0
        %590 = vmatpush1.msra.mxu0 %v502
        %591 = vmatprep.subr.mxu0 0.0
        %592 = vmatpush1.msra.mxu0 %v501
        %593 = vmatprep.subr.mxu0 0.0
        %594 = vmatpush1.msra.mxu0 %v500
        %595 = vmatprep.subr.mxu0 0.0
        %596 = vmatpush1.msra.mxu0 %v499
        %597 = vmatprep.subr.mxu0 0.0
        %598 = vmatpush1.msra.mxu0 %v498
        %599 = vmatprep.subr.mxu0 0.0
        %600 = vmatpush1.msra.mxu0 %v497
        %601 = vmatprep.subr.mxu0 0.0
        %602 = vmatpush1.msra.mxu0 %v496
        %603 = vmatprep.subr.mxu0 0.0
        %604 = vmatpush1.msra.mxu0 %v495
        %605 = vmatprep.subr.mxu0 0.0
        %606 = vmatpush1.msra.mxu0 %v494
        %607 = vmatprep.subr.mxu0 0.0
        %608 = vmatpush1.msra.mxu0 %v493
        %609 = vmatprep.subr.mxu0 0.0
        %610 = vmatpush1.msra.mxu0 %v492
        %611 = vmatprep.subr.mxu0 0.0
        %612 = vmatpush1.msra.mxu0 %v491
        %613 = vmatprep.subr.mxu0 0.0
        %614 = vmatpush1.msra.mxu0 %v490
        %615 = vmatprep.subr.mxu0 0.0
        %616 = vmatpush1.msra.mxu0 %v489
        %617 = vmatprep.subr.mxu0 0.0
        %618 = vmatpush1.msra.mxu0 %v488
        %619 = vmatprep.subr.mxu0 0.0
        %620 = vmatpush2.msra.mxu0 0.0
        %621 = vmatprep.subr.mxu0 0.0
        %622 = vmatpush2.msra.mxu0 0.0
        %623 = vmatprep.subr.mxu0 0.0
        %624 = vmatpush2.msra.mxu0 0.0
        %625 = vmatprep.subr.mxu0 0.0
        %626 = vmatpush2.msra.mxu0 0.0
        %627 = vmatprep.subr.mxu0 0.0
        %628 = vmatpush2.msra.mxu0 0.0
        %629 = vmatprep.subr.mxu0 0.0
        %630 = vmatpush2.msra.mxu0 0.0
        %631 = vmatprep.subr.mxu0 0.0
        %632 = vmatpush2.msra.mxu0 0.0
        %633 = vmatprep.subr.mxu0 0.0
        %634 = vmatpush2.msra.mxu0 0.0
        %635 = vmatprep.subr.mxu0 0.0
        %636 = vmatpush2.msra.mxu0 0.0
        %637 = vmatprep.subr.mxu0 0.0
        %638 = vmatpush2.msra.mxu0 0.0
        %639 = vmatprep.subr.mxu0 0.0
        %640 = vmatpush2.msra.mxu0 0.0
        %641 = vmatprep.subr.mxu0 0.0
        %642 = vmatpush2.msra.mxu0 0.0
        %643 = vmatprep.subr.mxu0 0.0
        %644 = vmatpush2.msra.mxu0 0.0
        %645 = vmatprep.subr.mxu0 0.0
        %646 = vmatpush2.msra.mxu0 0.0
        %647 = vmatprep.subr.mxu0 0.0
        %648 = vmatpush2.msra.mxu0 0.0
        %649 = vmatprep.subr.mxu0 0.0
        %650 = vmatpush2.msra.mxu0 0.0
        %651 = vmatprep.mubr.f32.mxu0 0.0
        %652 = vmatmul.mubr.f32.gmra.mxu0 %v451
        %v653 = vpop.f32.mrf.mxu0
        %v654 = vadd.f32 %v579, %v653
        %v655 = vpop.f32.mrf.mxu0
        %656 = vmatprep.mubr.f32.mxu0 0.0
        %657 = vmatmul.mubr.f32.gmra.mxu0 %v454
        %v658 = vpop.f32.mrf.mxu0
        %v659 = vadd.f32 %v584, %v658
        %v660 = vpop.f32.mrf.mxu0
        %661 = vdwg.mxu0
        %v662 = vadd.f32 %v192, %v654
        %v663 = vadd.f32 %v193, %v659
        %v666 = vrot.slane %v662, 7
        %v667 = vrot.slane %v663, 7
        %v668 = vsel %vm196, %v666, %v667
        %671 = vst [vmem:[#allocation2] sm:$0xfe] %v666
        %672 = vst [vmem:[#allocation2 + $0x18] sm:$0xff] %v668
        %673 = vst [vmem:[#allocation2 + $0x8] sm:$0xff] %v662
        %674 = vst [vmem:[#allocation2 + $0x20] sm:$0xff] %v663
        %v675 = vrot.slane %v662, 1
        %v676 = vrot.slane %v663, 1
        %v677 = vsel %vm206, %v675, %v676
        %680 = vst [vmem:[#allocation2 + $0x10] sm:$0xff] %v677
        %681 = vst [vmem:[#allocation2 + $0x28] sm:$0x7f] %v676
        %v682 = vld [vmem:[#allocation2] sm:$0xff]
        %v683 = vld [vmem:[#allocation2 + $0x8] sm:$0xff]
        %v684 = vld [vmem:[#allocation2 + $0x10] sm:$0xff]
        %v685 = vld [vmem:[#allocation2 + $0x18] sm:$0xff]
        %v686 = vld [vmem:[#allocation2 + $0x20] sm:$0xff]
        %v687 = vld [vmem:[#allocation2 + $0x28] sm:$0xff]
        %s688 = scalar_lea.vmem [#allocation3], 768
        %v689 = vld [vmem:[%s688] sm:$0xff]
        %v690 = vld [vmem:[%s688 + $0x8] sm:$0xff]
        %v691 = vld [vmem:[%s688 + $0x10] sm:$0xff]
        %v692 = vld [vmem:[%s688 + $0x18] sm:$0xff]
        %v693 = vld [vmem:[%s688 + $0x20] sm:$0xff]
        %v694 = vld [vmem:[%s688 + $0x28] sm:$0xff]
        %v695 = vld [vmem:[%s688 + $0x30] sm:$0xff]
        %v696 = vld [vmem:[%s688 + $0x38] sm:$0xff]
        %v697 = vld [vmem:[%s688 + $0x40] sm:$0xff]
        %v698 = vld [vmem:[%s688 + $0x48] sm:$0xff]
        %v699 = vld [vmem:[%s688 + $0x50] sm:$0xff]
        %v700 = vld [vmem:[%s688 + $0x58] sm:$0xff]
        %v701 = vld [vmem:[%s688 + $0x60] sm:$0xff]
        %v702 = vld [vmem:[%s688 + $0x68] sm:$0xff]
        %v703 = vld [vmem:[%s688 + $0x70] sm:$0xff]
        %v704 = vld [vmem:[%s688 + $0x78] sm:$0xff]
        %v705 = vld [vmem:[%s688 + $0x80] sm:$0xff]
        %v706 = vld [vmem:[%s688 + $0x88] sm:$0xff]
        %v707 = vld [vmem:[%s688 + $0x90] sm:$0xff]
        %v708 = vld [vmem:[%s688 + $0x98] sm:$0xff]
        %v709 = vld [vmem:[%s688 + $0xa0] sm:$0xff]
        %v710 = vld [vmem:[%s688 + $0xa8] sm:$0xff]
        %v711 = vld [vmem:[%s688 + $0xb0] sm:$0xff]
        %v712 = vld [vmem:[%s688 + $0xb8] sm:$0xff]
        %v713 = vld [vmem:[%s688 + $0xc0] sm:$0xff]
        %v714 = vld [vmem:[%s688 + $0xc8] sm:$0xff]
        %v715 = vld [vmem:[%s688 + $0xd0] sm:$0xff]
        %v716 = vld [vmem:[%s688 + $0xd8] sm:$0xff]
        %v717 = vld [vmem:[%s688 + $0xe0] sm:$0xff]
        %v718 = vld [vmem:[%s688 + $0xe8] sm:$0xff]
        %v719 = vld [vmem:[%s688 + $0xf0] sm:$0xff]
        %v720 = vld [vmem:[%s688 + $0xf8] sm:$0xff]
        %v721 = vld [vmem:[%s688 + $0x100] sm:$0xff]
        %v722 = vld [vmem:[%s688 + $0x108] sm:$0xff]
        %v723 = vld [vmem:[%s688 + $0x110] sm:$0xff]
        %v724 = vld [vmem:[%s688 + $0x118] sm:$0xff]
        %v725 = vld [vmem:[%s688 + $0x120] sm:$0xff]
        %v726 = vld [vmem:[%s688 + $0x128] sm:$0xff]
        %v727 = vld [vmem:[%s688 + $0x130] sm:$0xff]
        %v728 = vld [vmem:[%s688 + $0x138] sm:$0xff]
        %v729 = vld [vmem:[%s688 + $0x140] sm:$0xff]
        %v730 = vld [vmem:[%s688 + $0x148] sm:$0xff]
        %v731 = vld [vmem:[%s688 + $0x150] sm:$0xff]
        %v732 = vld [vmem:[%s688 + $0x158] sm:$0xff]
        %v733 = vld [vmem:[%s688 + $0x160] sm:$0xff]
        %v734 = vld [vmem:[%s688 + $0x168] sm:$0xff]
        %v735 = vld [vmem:[%s688 + $0x170] sm:$0xff]
        %v736 = vld [vmem:[%s688 + $0x178] sm:$0xff]
        %s737 = scalar_lea.vmem %s2, 2
        %v738 = vld [vmem:[%s737] sm:$0x1]
        %v740 = vlaneseq
        %v741 = vshrl.u32 %v740, 7
        %v742 = vsub.s32 0, %v741
        %v743 = vrot.slane %v738, %v742
        %745 = vmatprep.subr.mxu0 0.0
        %746 = vmatpush1.msra.mxu0 %v704
        %747 = vmatprep.subr.mxu0 0.0
        %748 = vmatpush1.msra.mxu0 %v703
        %749 = vmatprep.subr.mxu0 0.0
        %750 = vmatpush1.msra.mxu0 %v702
        %751 = vmatprep.subr.mxu0 0.0
        %752 = vmatpush1.msra.mxu0 %v701
        %753 = vmatprep.subr.mxu0 0.0
        %754 = vmatpush1.msra.mxu0 %v700
        %755 = vmatprep.subr.mxu0 0.0
        %756 = vmatpush1.msra.mxu0 %v699
        %757 = vmatprep.subr.mxu0 0.0
        %758 = vmatpush1.msra.mxu0 %v698
        %759 = vmatprep.subr.mxu0 0.0
        %760 = vmatpush1.msra.mxu0 %v697
        %761 = vmatprep.subr.mxu0 0.0
        %762 = vmatpush1.msra.mxu0 %v696
        %763 = vmatprep.subr.mxu0 0.0
        %764 = vmatpush1.msra.mxu0 %v695
        %765 = vmatprep.subr.mxu0 0.0
        %766 = vmatpush1.msra.mxu0 %v694
        %767 = vmatprep.subr.mxu0 0.0
        %768 = vmatpush1.msra.mxu0 %v693
        %769 = vmatprep.subr.mxu0 0.0
        %770 = vmatpush1.msra.mxu0 %v692
        %771 = vmatprep.subr.mxu0 0.0
        %772 = vmatpush1.msra.mxu0 %v691
        %773 = vmatprep.subr.mxu0 0.0
        %774 = vmatpush1.msra.mxu0 %v690
        %775 = vmatprep.subr.mxu0 0.0
        %776 = vmatpush1.msra.mxu0 %v689
        %777 = vmatprep.subr.mxu0 0.0
        %778 = vmatpush2.msra.mxu0 %v720
        %779 = vmatprep.subr.mxu0 0.0
        %780 = vmatpush2.msra.mxu0 %v719
        %781 = vmatprep.subr.mxu0 0.0
        %782 = vmatpush2.msra.mxu0 %v718
        %783 = vmatprep.subr.mxu0 0.0
        %784 = vmatpush2.msra.mxu0 %v717
        %785 = vmatprep.subr.mxu0 0.0
        %786 = vmatpush2.msra.mxu0 %v716
        %787 = vmatprep.subr.mxu0 0.0
        %788 = vmatpush2.msra.mxu0 %v715
        %789 = vmatprep.subr.mxu0 0.0
        %790 = vmatpush2.msra.mxu0 %v714
        %791 = vmatprep.subr.mxu0 0.0
        %792 = vmatpush2.msra.mxu0 %v713
        %793 = vmatprep.subr.mxu0 0.0
        %794 = vmatpush2.msra.mxu0 %v712
        %795 = vmatprep.subr.mxu0 0.0
        %796 = vmatpush2.msra.mxu0 %v711
        %797 = vmatprep.subr.mxu0 0.0
        %798 = vmatpush2.msra.mxu0 %v710
        %799 = vmatprep.subr.mxu0 0.0
        %800 = vmatpush2.msra.mxu0 %v709
        %801 = vmatprep.subr.mxu0 0.0
        %802 = vmatpush2.msra.mxu0 %v708
        %803 = vmatprep.subr.mxu0 0.0
        %804 = vmatpush2.msra.mxu0 %v707
        %805 = vmatprep.subr.mxu0 0.0
        %806 = vmatpush2.msra.mxu0 %v706
        %807 = vmatprep.subr.mxu0 0.0
        %808 = vmatpush2.msra.mxu0 %v705
        %809 = vmatprep.mubr.f32.mxu0 %v683
        %810 = vmatmul.mubr.f32.gmra.mxu0 %v682
        %v811 = vpop.f32.mrf.mxu0
        %v812 = vadd.f32 %v743, %v811
        %v813 = vpop.f32.mrf.mxu0
        %814 = vmatprep.mubr.f32.mxu0 %v686
        %815 = vmatmul.mubr.f32.gmra.mxu0 %v685
        %v816 = vpop.f32.mrf.mxu0
        %v817 = vadd.f32 %v743, %v816
        %v818 = vpop.f32.mrf.mxu0
        %819 = vdwg.mxu0
        %820 = vmatprep.subr.mxu0 0.0
        %821 = vmatpush1.msra.mxu0 %v736
        %822 = vmatprep.subr.mxu0 0.0
        %823 = vmatpush1.msra.mxu0 %v735
        %824 = vmatprep.subr.mxu0 0.0
        %825 = vmatpush1.msra.mxu0 %v734
        %826 = vmatprep.subr.mxu0 0.0
        %827 = vmatpush1.msra.mxu0 %v733
        %828 = vmatprep.subr.mxu0 0.0
        %829 = vmatpush1.msra.mxu0 %v732
        %830 = vmatprep.subr.mxu0 0.0
        %831 = vmatpush1.msra.mxu0 %v731
        %832 = vmatprep.subr.mxu0 0.0
        %833 = vmatpush1.msra.mxu0 %v730
        %834 = vmatprep.subr.mxu0 0.0
        %835 = vmatpush1.msra.mxu0 %v729
        %836 = vmatprep.subr.mxu0 0.0
        %837 = vmatpush1.msra.mxu0 %v728
        %838 = vmatprep.subr.mxu0 0.0
        %839 = vmatpush1.msra.mxu0 %v727
        %840 = vmatprep.subr.mxu0 0.0
        %841 = vmatpush1.msra.mxu0 %v726
        %842 = vmatprep.subr.mxu0 0.0
        %843 = vmatpush1.msra.mxu0 %v725
        %844 = vmatprep.subr.mxu0 0.0
        %845 = vmatpush1.msra.mxu0 %v724
        %846 = vmatprep.subr.mxu0 0.0
        %847 = vmatpush1.msra.mxu0 %v723
        %848 = vmatprep.subr.mxu0 0.0
        %849 = vmatpush1.msra.mxu0 %v722
        %850 = vmatprep.subr.mxu0 0.0
        %851 = vmatpush1.msra.mxu0 %v721
        %852 = vmatprep.subr.mxu0 0.0
        %853 = vmatpush2.msra.mxu0 0.0
        %854 = vmatprep.subr.mxu0 0.0
        %855 = vmatpush2.msra.mxu0 0.0
        %856 = vmatprep.subr.mxu0 0.0
        %857 = vmatpush2.msra.mxu0 0.0
        %858 = vmatprep.subr.mxu0 0.0
        %859 = vmatpush2.msra.mxu0 0.0
        %860 = vmatprep.subr.mxu0 0.0
        %861 = vmatpush2.msra.mxu0 0.0
        %862 = vmatprep.subr.mxu0 0.0
        %863 = vmatpush2.msra.mxu0 0.0
        %864 = vmatprep.subr.mxu0 0.0
        %865 = vmatpush2.msra.mxu0 0.0
        %866 = vmatprep.subr.mxu0 0.0
        %867 = vmatpush2.msra.mxu0 0.0
        %868 = vmatprep.subr.mxu0 0.0
        %869 = vmatpush2.msra.mxu0 0.0
        %870 = vmatprep.subr.mxu0 0.0
        %871 = vmatpush2.msra.mxu0 0.0
        %872 = vmatprep.subr.mxu0 0.0
        %873 = vmatpush2.msra.mxu0 0.0
        %874 = vmatprep.subr.mxu0 0.0
        %875 = vmatpush2.msra.mxu0 0.0
        %876 = vmatprep.subr.mxu0 0.0
        %877 = vmatpush2.msra.mxu0 0.0
        %878 = vmatprep.subr.mxu0 0.0
        %879 = vmatpush2.msra.mxu0 0.0
        %880 = vmatprep.subr.mxu0 0.0
        %881 = vmatpush2.msra.mxu0 0.0
        %882 = vmatprep.subr.mxu0 0.0
        %883 = vmatpush2.msra.mxu0 0.0
        %884 = vmatprep.mubr.f32.mxu0 0.0
        %885 = vmatmul.mubr.f32.gmra.mxu0 %v684
        %v886 = vpop.f32.mrf.mxu0
        %v887 = vadd.f32 %v812, %v886
        %v888 = vpop.f32.mrf.mxu0
        %889 = vmatprep.mubr.f32.mxu0 0.0
        %890 = vmatmul.mubr.f32.gmra.mxu0 %v687
        %v891 = vpop.f32.mrf.mxu0
        %v892 = vadd.f32 %v817, %v891
        %v893 = vpop.f32.mrf.mxu0
        %894 = vdwg.mxu0
        %vm895 = vcmp.gt.f32.partialorder %v887, 0.0
        %vm896 = vcmp.gt.f32.partialorder %v892, 0.0
        %v897 = vmul.f32 %v887, 0.01
        %v898 = vmul.f32 %v892, 0.01
        %v899 = vsel %vm895, %v887, %v897
        %v900 = vsel %vm896, %v892, %v898
        %v903 = vrot.slane %v899, 7
        %v904 = vrot.slane %v900, 7
        %v905 = vsel %vm196, %v903, %v904
        %908 = vst [vmem:[#allocation2] sm:$0xfe] %v903
        %909 = vst [vmem:[#allocation2 + $0x18] sm:$0xff] %v905
        %910 = vst [vmem:[#allocation2 + $0x8] sm:$0xff] %v899
        %911 = vst [vmem:[#allocation2 + $0x20] sm:$0xff] %v900
        %v912 = vrot.slane %v899, 1
        %v913 = vrot.slane %v900, 1
        %v914 = vsel %vm206, %v912, %v913
        %917 = vst [vmem:[#allocation2 + $0x10] sm:$0xff] %v914
        %918 = vst [vmem:[#allocation2 + $0x28] sm:$0x7f] %v913
        %v919 = vld [vmem:[#allocation2] sm:$0xff]
        %v920 = vld [vmem:[#allocation2 + $0x8] sm:$0xff]
        %v921 = vld [vmem:[#allocation2 + $0x10] sm:$0xff]
        %v922 = vld [vmem:[#allocation2 + $0x18] sm:$0xff]
        %v923 = vld [vmem:[#allocation2 + $0x20] sm:$0xff]
        %v924 = vld [vmem:[#allocation2 + $0x28] sm:$0xff]
        %s925 = scalar_lea.vmem [#allocation3], 1152
        %v926 = vld [vmem:[%s925] sm:$0xff]
        %v927 = vld [vmem:[%s925 + $0x8] sm:$0xff]
        %v928 = vld [vmem:[%s925 + $0x10] sm:$0xff]
        %v929 = vld [vmem:[%s925 + $0x18] sm:$0xff]
        %v930 = vld [vmem:[%s925 + $0x20] sm:$0xff]
        %v931 = vld [vmem:[%s925 + $0x28] sm:$0xff]
        %v932 = vld [vmem:[%s925 + $0x30] sm:$0xff]
        %v933 = vld [vmem:[%s925 + $0x38] sm:$0xff]
        %v934 = vld [vmem:[%s925 + $0x40] sm:$0xff]
        %v935 = vld [vmem:[%s925 + $0x48] sm:$0xff]
        %v936 = vld [vmem:[%s925 + $0x50] sm:$0xff]
        %v937 = vld [vmem:[%s925 + $0x58] sm:$0xff]
        %v938 = vld [vmem:[%s925 + $0x60] sm:$0xff]
        %v939 = vld [vmem:[%s925 + $0x68] sm:$0xff]
        %v940 = vld [vmem:[%s925 + $0x70] sm:$0xff]
        %v941 = vld [vmem:[%s925 + $0x78] sm:$0xff]
        %v942 = vld [vmem:[%s925 + $0x80] sm:$0xff]
        %v943 = vld [vmem:[%s925 + $0x88] sm:$0xff]
        %v944 = vld [vmem:[%s925 + $0x90] sm:$0xff]
        %v945 = vld [vmem:[%s925 + $0x98] sm:$0xff]
        %v946 = vld [vmem:[%s925 + $0xa0] sm:$0xff]
        %v947 = vld [vmem:[%s925 + $0xa8] sm:$0xff]
        %v948 = vld [vmem:[%s925 + $0xb0] sm:$0xff]
        %v949 = vld [vmem:[%s925 + $0xb8] sm:$0xff]
        %v950 = vld [vmem:[%s925 + $0xc0] sm:$0xff]
        %v951 = vld [vmem:[%s925 + $0xc8] sm:$0xff]
        %v952 = vld [vmem:[%s925 + $0xd0] sm:$0xff]
        %v953 = vld [vmem:[%s925 + $0xd8] sm:$0xff]
        %v954 = vld [vmem:[%s925 + $0xe0] sm:$0xff]
        %v955 = vld [vmem:[%s925 + $0xe8] sm:$0xff]
        %v956 = vld [vmem:[%s925 + $0xf0] sm:$0xff]
        %v957 = vld [vmem:[%s925 + $0xf8] sm:$0xff]
        %v958 = vld [vmem:[%s925 + $0x100] sm:$0xff]
        %v959 = vld [vmem:[%s925 + $0x108] sm:$0xff]
        %v960 = vld [vmem:[%s925 + $0x110] sm:$0xff]
        %v961 = vld [vmem:[%s925 + $0x118] sm:$0xff]
        %v962 = vld [vmem:[%s925 + $0x120] sm:$0xff]
        %v963 = vld [vmem:[%s925 + $0x128] sm:$0xff]
        %v964 = vld [vmem:[%s925 + $0x130] sm:$0xff]
        %v965 = vld [vmem:[%s925 + $0x138] sm:$0xff]
        %v966 = vld [vmem:[%s925 + $0x140] sm:$0xff]
        %v967 = vld [vmem:[%s925 + $0x148] sm:$0xff]
        %v968 = vld [vmem:[%s925 + $0x150] sm:$0xff]
        %v969 = vld [vmem:[%s925 + $0x158] sm:$0xff]
        %v970 = vld [vmem:[%s925 + $0x160] sm:$0xff]
        %v971 = vld [vmem:[%s925 + $0x168] sm:$0xff]
        %v972 = vld [vmem:[%s925 + $0x170] sm:$0xff]
        %v973 = vld [vmem:[%s925 + $0x178] sm:$0xff]
        %s974 = scalar_lea.vmem %s2, 3
        %v975 = vld [vmem:[%s974] sm:$0x1]
        %v977 = vlaneseq
        %v978 = vshrl.u32 %v977, 7
        %v979 = vsub.s32 0, %v978
        %v980 = vrot.slane %v975, %v979
        %982 = vmatprep.subr.mxu0 0.0
        %983 = vmatpush1.msra.mxu0 %v941
        %984 = vmatprep.subr.mxu0 0.0
        %985 = vmatpush1.msra.mxu0 %v940
        %986 = vmatprep.subr.mxu0 0.0
        %987 = vmatpush1.msra.mxu0 %v939
        %988 = vmatprep.subr.mxu0 0.0
        %989 = vmatpush1.msra.mxu0 %v938
        %990 = vmatprep.subr.mxu0 0.0
        %991 = vmatpush1.msra.mxu0 %v937
        %992 = vmatprep.subr.mxu0 0.0
        %993 = vmatpush1.msra.mxu0 %v936
        %994 = vmatprep.subr.mxu0 0.0
        %995 = vmatpush1.msra.mxu0 %v935
        %996 = vmatprep.subr.mxu0 0.0
        %997 = vmatpush1.msra.mxu0 %v934
        %998 = vmatprep.subr.mxu0 0.0
        %999 = vmatpush1.msra.mxu0 %v933
        %1000 = vmatprep.subr.mxu0 0.0
        %1001 = vmatpush1.msra.mxu0 %v932
        %1002 = vmatprep.subr.mxu0 0.0
        %1003 = vmatpush1.msra.mxu0 %v931
        %1004 = vmatprep.subr.mxu0 0.0
        %1005 = vmatpush1.msra.mxu0 %v930
        %1006 = vmatprep.subr.mxu0 0.0
        %1007 = vmatpush1.msra.mxu0 %v929
        %1008 = vmatprep.subr.mxu0 0.0
        %1009 = vmatpush1.msra.mxu0 %v928
        %1010 = vmatprep.subr.mxu0 0.0
        %1011 = vmatpush1.msra.mxu0 %v927
        %1012 = vmatprep.subr.mxu0 0.0
        %1013 = vmatpush1.msra.mxu0 %v926
        %1014 = vmatprep.subr.mxu0 0.0
        %1015 = vmatpush2.msra.mxu0 %v957
        %1016 = vmatprep.subr.mxu0 0.0
        %1017 = vmatpush2.msra.mxu0 %v956
        %1018 = vmatprep.subr.mxu0 0.0
        %1019 = vmatpush2.msra.mxu0 %v955
        %1020 = vmatprep.subr.mxu0 0.0
        %1021 = vmatpush2.msra.mxu0 %v954
        %1022 = vmatprep.subr.mxu0 0.0
        %1023 = vmatpush2.msra.mxu0 %v953
        %1024 = vmatprep.subr.mxu0 0.0
        %1025 = vmatpush2.msra.mxu0 %v952
        %1026 = vmatprep.subr.mxu0 0.0
        %1027 = vmatpush2.msra.mxu0 %v951
        %1028 = vmatprep.subr.mxu0 0.0
        %1029 = vmatpush2.msra.mxu0 %v950
        %1030 = vmatprep.subr.mxu0 0.0
        %1031 = vmatpush2.msra.mxu0 %v949
        %1032 = vmatprep.subr.mxu0 0.0
        %1033 = vmatpush2.msra.mxu0 %v948
        %1034 = vmatprep.subr.mxu0 0.0
        %1035 = vmatpush2.msra.mxu0 %v947
        %1036 = vmatprep.subr.mxu0 0.0
        %1037 = vmatpush2.msra.mxu0 %v946
        %1038 = vmatprep.subr.mxu0 0.0
        %1039 = vmatpush2.msra.mxu0 %v945
        %1040 = vmatprep.subr.mxu0 0.0
        %1041 = vmatpush2.msra.mxu0 %v944
        %1042 = vmatprep.subr.mxu0 0.0
        %1043 = vmatpush2.msra.mxu0 %v943
        %1044 = vmatprep.subr.mxu0 0.0
        %1045 = vmatpush2.msra.mxu0 %v942
        %1046 = vmatprep.mubr.f32.mxu0 %v920
        %1047 = vmatmul.mubr.f32.gmra.mxu0 %v919
        %v1048 = vpop.f32.mrf.mxu0
        %v1049 = vadd.f32 %v980, %v1048
        %v1050 = vpop.f32.mrf.mxu0
        %1051 = vmatprep.mubr.f32.mxu0 %v923
        %1052 = vmatmul.mubr.f32.gmra.mxu0 %v922
        %v1053 = vpop.f32.mrf.mxu0
        %v1054 = vadd.f32 %v980, %v1053
        %v1055 = vpop.f32.mrf.mxu0
        %1056 = vdwg.mxu0
        %1057 = vmatprep.subr.mxu0 0.0
        %1058 = vmatpush1.msra.mxu0 %v973
        %1059 = vmatprep.subr.mxu0 0.0
        %1060 = vmatpush1.msra.mxu0 %v972
        %1061 = vmatprep.subr.mxu0 0.0
        %1062 = vmatpush1.msra.mxu0 %v971
        %1063 = vmatprep.subr.mxu0 0.0
        %1064 = vmatpush1.msra.mxu0 %v970
        %1065 = vmatprep.subr.mxu0 0.0
        %1066 = vmatpush1.msra.mxu0 %v969
        %1067 = vmatprep.subr.mxu0 0.0
        %1068 = vmatpush1.msra.mxu0 %v968
        %1069 = vmatprep.subr.mxu0 0.0
        %1070 = vmatpush1.msra.mxu0 %v967
        %1071 = vmatprep.subr.mxu0 0.0
        %1072 = vmatpush1.msra.mxu0 %v966
        %1073 = vmatprep.subr.mxu0 0.0
        %1074 = vmatpush1.msra.mxu0 %v965
        %1075 = vmatprep.subr.mxu0 0.0
        %1076 = vmatpush1.msra.mxu0 %v964
        %1077 = vmatprep.subr.mxu0 0.0
        %1078 = vmatpush1.msra.mxu0 %v963
        %1079 = vmatprep.subr.mxu0 0.0
        %1080 = vmatpush1.msra.mxu0 %v962
        %1081 = vmatprep.subr.mxu0 0.0
        %1082 = vmatpush1.msra.mxu0 %v961
        %1083 = vmatprep.subr.mxu0 0.0
        %1084 = vmatpush1.msra.mxu0 %v960
        %1085 = vmatprep.subr.mxu0 0.0
        %1086 = vmatpush1.msra.mxu0 %v959
        %1087 = vmatprep.subr.mxu0 0.0
        %1088 = vmatpush1.msra.mxu0 %v958
        %1089 = vmatprep.subr.mxu0 0.0
        %1090 = vmatpush2.msra.mxu0 0.0
        %1091 = vmatprep.subr.mxu0 0.0
        %1092 = vmatpush2.msra.mxu0 0.0
        %1093 = vmatprep.subr.mxu0 0.0
        %1094 = vmatpush2.msra.mxu0 0.0
        %1095 = vmatprep.subr.mxu0 0.0
        %1096 = vmatpush2.msra.mxu0 0.0
        %1097 = vmatprep.subr.mxu0 0.0
        %1098 = vmatpush2.msra.mxu0 0.0
        %1099 = vmatprep.subr.mxu0 0.0
        %1100 = vmatpush2.msra.mxu0 0.0
        %1101 = vmatprep.subr.mxu0 0.0
        %1102 = vmatpush2.msra.mxu0 0.0
        %1103 = vmatprep.subr.mxu0 0.0
        %1104 = vmatpush2.msra.mxu0 0.0
        %1105 = vmatprep.subr.mxu0 0.0
        %1106 = vmatpush2.msra.mxu0 0.0
        %1107 = vmatprep.subr.mxu0 0.0
        %1108 = vmatpush2.msra.mxu0 0.0
        %1109 = vmatprep.subr.mxu0 0.0
        %1110 = vmatpush2.msra.mxu0 0.0
        %1111 = vmatprep.subr.mxu0 0.0
        %1112 = vmatpush2.msra.mxu0 0.0
        %1113 = vmatprep.subr.mxu0 0.0
        %1114 = vmatpush2.msra.mxu0 0.0
        %1115 = vmatprep.subr.mxu0 0.0
        %1116 = vmatpush2.msra.mxu0 0.0
        %1117 = vmatprep.subr.mxu0 0.0
        %1118 = vmatpush2.msra.mxu0 0.0
        %1119 = vmatprep.subr.mxu0 0.0
        %1120 = vmatpush2.msra.mxu0 0.0
        %1121 = vmatprep.mubr.f32.mxu0 0.0
        %1122 = vmatmul.mubr.f32.gmra.mxu0 %v921
        %v1123 = vpop.f32.mrf.mxu0
        %v1124 = vadd.f32 %v1049, %v1123
        %v1125 = vpop.f32.mrf.mxu0
        %1126 = vmatprep.mubr.f32.mxu0 0.0
        %1127 = vmatmul.mubr.f32.gmra.mxu0 %v924
        %v1128 = vpop.f32.mrf.mxu0
        %v1129 = vadd.f32 %v1054, %v1128
        %v1130 = vpop.f32.mrf.mxu0
        %1131 = vdwg.mxu0
        %v1132 = vadd.f32 %v662, %v1124
        %v1133 = vadd.f32 %v663, %v1129
        %1134 = vst [vmem:[%s185] sm:$0xff] %v1132
        %1135 = vst [vmem:[%s185 + $0x8] sm:$0xff] %v1133
        %p1136 = scmp.lt.s32.totalorder %s15, 1
        %s1137 = scalar_select %p1136, %s15, 1
        %s1138 = smul.addr %s1137, 2
        %s1139 = smul.addr %s1138, 8
        %s1140 = scalar_lea.vmem %s3, %s1139
        // Predicated region
        $region37: #{resnet_forward_pallas.1} parent=31 // pred_check
          %p1141 = pneg %p101
        $region38: #{resnet_forward_pallas.1} parent=31 // pred_check_branch
          %1143 = sbr.rel (%p1141) target = $region40
        $region39: #{resnet_forward_pallas.1} parent=31 // pred_region
          _
        $region40: #{resnet_forward_pallas.1} parent=31 // pred_fallthru
          _
      $region32: #{resnet_forward_pallas.1} parent=5 // pred_fallthru
        _
      %p1144 = scmp.le.s32.totalorder 2, %s10
      // Predicated region
      $region41: #{resnet_forward_pallas.1} parent=5 // pred_check
        %p1145 = pneg %p1144
      $region42: #{resnet_forward_pallas.1} parent=5 // pred_check_branch
        %1147 = sbr.rel (%p1145) target = $region44
      $region43: #{resnet_forward_pallas.1} parent=5 // pred_region
        %s1148 = ssub.s32 %s10, 2
        // Predicated region
        $region45: #{resnet_forward_pallas.1} parent=43 // pred_check
          %p1149 = pneg %p107
        $region46: #{resnet_forward_pallas.1} parent=43 // pred_check_branch
          %1151 = sbr.rel (%p1149) target = $region48
        $region47: #{resnet_forward_pallas.1} parent=43 // pred_region
          %p1152 = scmp.lt.s32.totalorder %s16, 1
          %s1153 = scalar_select %p1152, %s16, 1
          %s1154 = smul.addr %s1153, 2
          %s1155 = smul.addr %s1154, 8
          %s1156 = scalar_lea.vmem %s3, %s1155
        $region48: #{resnet_forward_pallas.1} parent=43 // pred_fallthru
          _
      $region44: #{resnet_forward_pallas.1} parent=5 // pred_fallthru
        _
    $region6: #{resnet_forward_pallas.1} parent=1 // loop_footer
      %s14 = sadd.s32 1, %s10
    $region7: #{resnet_forward_pallas.1} parent=1 // loop_footer_branch
      %9 = sbr.rel target = $region3
    $region8: #{resnet_forward_pallas.1} parent=1 // loop_exit
      _
    %1157 = vsyncpa [#allocation4], 1
    %s1158 = scalar_lea.sflag [#allocation4], 1
    %1159 = vsyncpa %s1158, 1

</llo_original>
